<compile_context>
chip_gen: v7x
topology: tpu7x:2x2x1
jax: 0.10.0
libtpu: 0.0.40
codegen_flags: <defaults>
</compile_context>

<pallas_src>
import functools

import jax
import jax.numpy as jnp
from jax.experimental import pallas as pl
from jax.experimental.pallas import tpu as pltpu


_LANE = 128          # lane-dense feature padding (bump to 256 for peak v7x MXU fill)
_SUBLANE = 16        # node-axis padding multiple (safe for bf16 packed sublanes)
_BIG_TILE = 256      # (TQ, TK) tile for the N^2 aggregation when N is large
_VMEM_LIMIT = 48 * 1024 * 1024


def _round_up(x, m):
    return ((x + m - 1) // m) * m


def _linear_norm_kernel(x_ref, w_ref, b_ref, h_ref, nh_ref):
    """h = x @ W + b ; nh = h / max(||h||_2, 1e-12)  (row-wise)."""
    h = jnp.dot(x_ref[...], w_ref[...], preferred_element_type=jnp.float32)
    h = h + b_ref[...]
    sumsq = jnp.sum(h * h, axis=-1, keepdims=True)
    # rsqrt of the clamped sum-of-squares == 1 / max(norm, 1e-12); the
    # transcendental goes to the EUP and the per-element divide becomes a mul.
    inv = jax.lax.rsqrt(jnp.maximum(sumsq, 1e-24))
    nh = h * inv
    h_ref[...] = h.astype(h_ref.dtype)
    nh_ref[...] = nh.astype(nh_ref.dtype)


def _adapt_agg_kernel(ew_ref, nhq_ref, nhk_ref, hk_ref, o_ref, acc_ref, *,
                      apply_relu):
    """One (TQ, TK) tile of: out = (edge_weight * (nh @ nh^T)) @ h."""
    k = pl.program_id(2)

    @pl.when(k == 0)
    def _():
        acc_ref[...] = jnp.zeros_like(acc_ref)

    # Cosine tile: contract the feature axis of both operands directly on the
    # MXU (no in-kernel transpose), f32 accumulation.
    cos = jax.lax.dot_general(
        nhq_ref[...], nhk_ref[...],
        dimension_numbers=(((1,), (1,)), ((), ())),
        preferred_element_type=jnp.float32)                 # (TQ, TK) f32
    mod = ew_ref[0] * cos                                   # f32 elementwise
    acc_ref[...] += jnp.dot(mod.astype(hk_ref.dtype), hk_ref[...],
                            preferred_element_type=jnp.float32)

    @pl.when(k == pl.num_programs(2) - 1)
    def _():
        out = acc_ref[...]
        if apply_relu:
            out = jnp.maximum(out, 0.0)
        o_ref[...] = out.astype(o_ref.dtype)


def adapt_conv(x, edge_weight, weight, bias, *, is_last=False,
               mxu_dtype=jnp.bfloat16):
    """AdaptConv forward.

    x: (B, N, Din) f32, edge_weight: (B, N, N) f32,
    weight: (Dout, Din), bias: (Dout,).
    mxu_dtype: operand dtype for the two O(N^2) matmuls (accumulation is
    always f32); use jnp.float32 for a bit-strict path.
    """
    B, N, Din = x.shape
    Dout = weight.shape[0]
    f32 = jnp.float32

    din_p = _round_up(Din, _LANE)
    dout_p = _round_up(Dout, _LANE)
    if N >= _BIG_TILE:
        tq = tk = _BIG_TILE
        n_p = _round_up(N, _BIG_TILE)
    else:
        n_p = _round_up(N, _SUBLANE)
        tq = tk = n_p
    nq = n_p // tq
    nk = n_p // tk
    rows = B * n_p
    tm = _BIG_TILE if n_p % _BIG_TILE == 0 else n_p   # row tile for the linear

    # Zero-padded, lane-dense operands.  Zero padding keeps row norms and the
    # aggregation exact; padded rows/cols are sliced away at the end.
    x_p = jnp.zeros((B, n_p, din_p), f32).at[:, :N, :Din].set(x.astype(f32))
    ew_p = jnp.zeros((B, n_p, n_p), f32).at[:, :N, :N].set(
        edge_weight.astype(f32))
    w_p = jnp.zeros((din_p, dout_p), f32).at[:Din, :Dout].set(
        weight.T.astype(f32))                       # pre-transposed once, here
    b_p = jnp.zeros((1, dout_p), f32).at[0, :Dout].set(bias.astype(f32))
    x_flat = x_p.reshape(rows, din_p)

    # ---- stage 1: fused linear + L2-normalize over all B*N rows -------------
    h_flat, nh_flat = pl.pallas_call(
        _linear_norm_kernel,
        out_shape=(jax.ShapeDtypeStruct((rows, dout_p), mxu_dtype),
                   jax.ShapeDtypeStruct((rows, dout_p), mxu_dtype)),
        grid_spec=pltpu.PrefetchScalarGridSpec(
            num_scalar_prefetch=0,
            grid=(rows // tm,),
            in_specs=[
                pl.BlockSpec((tm, din_p), lambda i: (i, 0)),
                pl.BlockSpec((din_p, dout_p), lambda i: (0, 0)),
                pl.BlockSpec((1, dout_p), lambda i: (0, 0)),
            ],
            out_specs=[
                pl.BlockSpec((tm, dout_p), lambda i: (i, 0)),
                pl.BlockSpec((tm, dout_p), lambda i: (i, 0)),
            ],
        ),
        compiler_params=pltpu.CompilerParams(
            dimension_semantics=("parallel",),
            vmem_limit_bytes=_VMEM_LIMIT),
    )(x_flat, w_p, b_p)

    # ---- stage 2: tiled cosine-modulated aggregation -------------------------
    kernel = functools.partial(_adapt_agg_kernel, apply_relu=not is_last)

    def _agg_call(ew_spec):
        return pl.pallas_call(
            kernel,
            out_shape=jax.ShapeDtypeStruct((rows, dout_p), jnp.float32),
            grid_spec=pltpu.PrefetchScalarGridSpec(
                num_scalar_prefetch=0,
                grid=(B, nq, nk),                      # reduction axis last
                in_specs=[
                    ew_spec,
                    pl.BlockSpec((tq, dout_p), lambda b, q, k: (b * nq + q, 0)),
                    pl.BlockSpec((tk, dout_p), lambda b, q, k: (b * nk + k, 0)),
                    pl.BlockSpec((tk, dout_p), lambda b, q, k: (b * nk + k, 0)),
                ],
                out_specs=pl.BlockSpec((tq, dout_p),
                                       lambda b, q, k: (b * nq + q, 0)),
                scratch_shapes=[pltpu.VMEM((tq, dout_p), jnp.float32)],
            ),
            compiler_params=pltpu.CompilerParams(
                dimension_semantics=("parallel", "parallel", "arbitrary"),
                vmem_limit_bytes=_VMEM_LIMIT),
        )(ew_p, nh_flat, nh_flat, h_flat)

    ew_idx = lambda b, q, k: (b, q, k)
    try:
        # edge_weight is the only O(N^2) stream -> deepen its pipeline buffer.
        out_flat = _agg_call(pl.BlockSpec((1, tq, tk), ew_idx,
                                          pipeline_mode=pl.Buffered(3)))
    except Exception:
        # Fall back to the default double-buffered pipeline if Buffered is
        # not supported by this JAX version.
        out_flat = _agg_call(pl.BlockSpec((1, tq, tk), ew_idx))

    return out_flat.reshape(B, n_p, dout_p)[:, :N, :Dout]


def adapt_conv_ref(x, edge_weight, weight, bias, *, is_last=False):
    """Pure-JAX reference (f32, highest matmul precision)."""
    hp = jax.lax.Precision.HIGHEST
    h = jnp.einsum('bnd,od->bno', x, weight, precision=hp) + bias
    norm = jnp.sqrt(jnp.sum(h * h, axis=-1, keepdims=True))
    nh = h / jnp.maximum(norm, 1e-12)
    cos = jnp.einsum('bij,bkj->bik', nh, nh, precision=hp)
    out = jnp.einsum('bpq,bqc->bpc', edge_weight * cos, h, precision=hp)
    if not is_last:
        out = jnp.maximum(out, 0.0)
    return out


if __name__ == "__main__":
    # Small deterministic shapes: batch=2, nodes=8, in_dim=16, out_dim=32.
    B, N, Din, Dout = 2, 8, 16, 32
    key = jax.random.PRNGKey(0)
    kx, kew, kw, kb = jax.random.split(key, 4)

    x = jax.random.normal(kx, (B, N, Din), dtype=jnp.float32)
    edge_weight = jax.random.uniform(kew, (B, N, N), dtype=jnp.float32)
    weight = jax.random.normal(kw, (Dout, Din), dtype=jnp.float32) * 0.1
    bias = jax.random.normal(kb, (Dout,), dtype=jnp.float32) * 0.1

    # TODO(synk): nn.Dropout at p=0.0 / eval is an identity; no RNG dropout path.
    ref = adapt_conv_ref(x, edge_weight, weight, bias, is_last=False)
    ref_last = adapt_conv_ref(x, edge_weight, weight, bias, is_last=True)

    # Strict f32-MXU path.
    out_f32 = jax.block_until_ready(
        adapt_conv(x, edge_weight, weight, bias, is_last=False,
                   mxu_dtype=jnp.float32))
    assert out_f32.shape == (B, N, Dout)
    assert jnp.allclose(out_f32, ref, atol=1e-4, rtol=1e-4)

    out_f32_last = jax.block_until_ready(
        adapt_conv(x, edge_weight, weight, bias, is_last=True,
                   mxu_dtype=jnp.float32))
    assert jnp.allclose(out_f32_last, ref_last, atol=1e-4, rtol=1e-4)

    # Default fast path: bf16 MXU operands, f32 accumulation & elementwise.
    out_bf16 = jax.block_until_ready(
        adapt_conv(x, edge_weight, weight, bias, is_last=False))
    assert out_bf16.shape == (B, N, Dout)
    assert jnp.allclose(out_bf16, ref, atol=5e-2, rtol=5e-2)

    print("KERNEL_OK")
</pallas_src>

<mosaic_0001>
module attributes {stable_mosaic.version = 11 : i64} {
  func.func @_linear_norm_kernel(%arg0: i32, %arg1: memref<16x128xf32, #tpu.memory_space<vmem>>, %arg2: memref<128x128xf32, #tpu.memory_space<vmem>>, %arg3: memref<1x128xf32, #tpu.memory_space<vmem>>, %arg4: memref<16x128xf32, #tpu.memory_space<vmem>>, %arg5: memref<16x128xf32, #tpu.memory_space<vmem>>) attributes {dimension_semantics = [#tpu.dimension_semantics<parallel>], iteration_bounds = array<i64: 2>, scalar_prefetch = 0 : i64, scratch_operands = 0 : i64, tpu.core_type = #tpu.core_type<tc>, window_params = [{transform_indices = @transform_0, window_bounds = array<i64: 16, 128>}, {pipeline_mode = #tpu.pipeline_mode<synchronous>, transform_indices = @transform_1, window_bounds = array<i64: 128, 128>}, {pipeline_mode = #tpu.pipeline_mode<synchronous>, transform_indices = @transform_2, window_bounds = array<i64: 1, 128>}, {transform_indices = @transform_3, window_bounds = array<i64: 16, 128>}, {transform_indices = @transform_4, window_bounds = array<i64: 16, 128>}]} {
    %c0 = arith.constant 0 : index
    %c0_0 = arith.constant 0 : index
    %0 = vector.load %arg1[%c0, %c0_0] : memref<16x128xf32, #tpu.memory_space<vmem>>, vector<16x128xf32>
    %c0_1 = arith.constant 0 : index
    %c0_2 = arith.constant 0 : index
    %1 = vector.load %arg2[%c0_1, %c0_2] : memref<128x128xf32, #tpu.memory_space<vmem>>, vector<128x128xf32>
    %cst = arith.constant dense<0.000000e+00> : vector<16x128xf32>
    %2 = tpu.matmul %0, %1, %cst {dimension_numbers = #tpu.dot_dimension_numbers<[1], [0], [0], [1], [0, 0, 1, 1], [], []>} : vector<16x128xf32>, vector<128x128xf32>, vector<16x128xf32> -> vector<16x128xf32>
    %c0_3 = arith.constant 0 : index
    %c0_4 = arith.constant 0 : index
    %3 = vector.load %arg3[%c0_3, %c0_4] : memref<1x128xf32, #tpu.memory_space<vmem>>, vector<1x128xf32>
    %4 = vector.broadcast %3 : vector<1x128xf32> to vector<16x128xf32>
    %5 = arith.addf %2, %4 : vector<16x128xf32>
    %6 = arith.mulf %5, %5 : vector<16x128xf32>
    %cst_5 = arith.constant dense<0.000000e+00> : vector<16xf32>
    %7 = vector.multi_reduction <add>, %6, %cst_5 [1] : vector<16x128xf32> to vector<16xf32>
    %8 = vector.shape_cast %7 : vector<16xf32> to vector<16x1xf32>
    %cst_6 = arith.constant 1.000000e-24 : f32
    %9 = vector.broadcast %cst_6 : f32 to vector<16x1xf32>
    %10 = arith.maximumf %8, %9 : vector<16x1xf32>
    %11 = math.rsqrt %10 : vector<16x1xf32>
    %12 = vector.broadcast %11 : vector<16x1xf32> to vector<16x128xf32>
    %13 = arith.mulf %5, %12 : vector<16x128xf32>
    %c0_7 = arith.constant 0 : index
    %c0_8 = arith.constant 0 : index
    %14 = vector.load %arg4[%c0_7, %c0_8] : memref<16x128xf32, #tpu.memory_space<vmem>>, vector<16x128xf32>
    tpu.vector_store %arg4[%c0_7, %c0_8], %5 {strides = array<i32>} : memref<16x128xf32, #tpu.memory_space<vmem>>, vector<16x128xf32>,
    %c0_9 = arith.constant 0 : index
    %c0_10 = arith.constant 0 : index
    %15 = vector.load %arg5[%c0_9, %c0_10] : memref<16x128xf32, #tpu.memory_space<vmem>>, vector<16x128xf32>
    tpu.vector_store %arg5[%c0_9, %c0_10], %13 {strides = array<i32>} : memref<16x128xf32, #tpu.memory_space<vmem>>, vector<16x128xf32>,
    return
  }
  func.func @transform_0(%arg0: i32) -> (i32, i32) {
    %c0_i32 = arith.constant 0 : i32
    %c0_i32_0 = arith.constant 0 : i32
    return %arg0, %c0_i32 : i32, i32
  }
  func.func @transform_1(%arg0: i32) -> (i32, i32) {
    %c0_i32 = arith.constant 0 : i32
    %c0_i32_0 = arith.constant 0 : i32
    %c0_i32_1 = arith.constant 0 : i32
    return %c0_i32, %c0_i32_0 : i32, i32
  }
  func.func @transform_2(%arg0: i32) -> (i32, i32) {
    %c0_i32 = arith.constant 0 : i32
    %c0_i32_0 = arith.constant 0 : i32
    %c0_i32_1 = arith.constant 0 : i32
    return %c0_i32, %c0_i32_0 : i32, i32
  }
  func.func @transform_3(%arg0: i32) -> (i32, i32) {
    %c0_i32 = arith.constant 0 : i32
    %c0_i32_0 = arith.constant 0 : i32
    return %arg0, %c0_i32 : i32, i32
  }
  func.func @transform_4(%arg0: i32) -> (i32, i32) {
    %c0_i32 = arith.constant 0 : i32
    %c0_i32_0 = arith.constant 0 : i32
    return %arg0, %c0_i32 : i32, i32
  }
}

</mosaic_0001>

<llo_original>
// kernel: tpu_custom_call.1
$region0: #{tpu_custom_call.1}
  #allocation0 [shape = 'u32[]', space=smem, size = 0x4, offset = 0x4, fixed_abs, tag = 'smem constant byte address 0x4 - core index']
  #allocation1 [shape = 'u32[144,128]{1,0:T(1,128)}', space=vmem, size = 0x12000, scoped, tag = 'internal scratch']
  %s0 = inlined_call_operand.hbm [shape: f32[32,128], index: 0, kind: input, shape index: {}]
  %s1 = inlined_call_operand.hbm [shape: f32[128,128], index: 1, kind: input, shape index: {}]
  %s2 = inlined_call_operand.vmem [shape: f32[1,128], index: 2, kind: input, shape index: {}]
  %s3 = inlined_call_operand.hbm [shape: f32[32,128], index: 3, kind: output, shape index: {0}]
  %s4 = inlined_call_operand.hbm [shape: f32[32,128], index: 4, kind: output, shape index: {1}]
  %5 = xla_tuple %s3, %s4
  %s6 = sld [smem:[#allocation0]]
  $region61: #{tpu_custom_call.1} parent=0
    _
  %s8 = ssub.s32 1, %s6
  %s9 = scalar_select 0, %s8, %s6
  $region1: #{tpu_custom_call.1} parent=0
    #allocation2 [shape = 'u8[16384]{0}', space=vmem, size = 0x4000, scoped, tag = 'input window, operand 0']
    #allocation3 [shape = 's32[2]{0}', space=sflag, size = 0x8, scoped, tag = 'scoped memory for tpu_custom_call.1']
    #allocation4 [shape = 's32[2]{0}', space=sflag, size = 0x8, scoped, tag = 'scoped memory for tpu_custom_call.1']
    #allocation5 [shape = 'u8[65536]{0}', space=vmem, size = 0x10000, scoped, tag = 'input window, operand 1, single buffered']
    #allocation6 [shape = 's32[1]{0}', space=sflag, size = 0x4, scoped, tag = 'scoped memory for tpu_custom_call.1']
    #allocation7 [shape = 'u8[16384]{0}', space=vmem, size = 0x4000, scoped, tag = 'output window, operand 0']
    #allocation8 [shape = 'u8[16384]{0}', space=vmem, size = 0x4000, scoped, tag = 'output window, operand 1']
    #allocation9 [shape = 's32[2]{0}', space=sflag, size = 0x8, scoped, tag = 'scoped memory for tpu_custom_call.1']
    %10 = vsyncpa [#allocation3], 0
    %s11 = scalar_lea.sflag [#allocation3], 1
    %12 = vsyncpa %s11, 0
    %13 = vsyncpa [#allocation6], 0
    %14 = vsyncpa [#allocation4], 0
    %s15 = scalar_lea.sflag [#allocation4], 1
    %16 = vsyncpa %s15, 0
    %17 = vsyncpa [#allocation9], 0
    %s18 = scalar_lea.sflag [#allocation9], 1
    %19 = vsyncpa %s18, 0
    loop: start=0, step=1, limit=4
    $region2: #{tpu_custom_call.1} parent=1 // loop_pre_header
      _
    $region3: #{tpu_custom_call.1} parent=1 // loop_header
      %s21 = sphi 0, %s25
      %p22 = scmp.ge.s32.totalorder %s21, 4
      %s31 = sphi 0, %s33
      %s34 = sphi 0, %s31
      %s35 = sphi 0, %s34
      %s51 = sphi 0, %s35
      %s55 = sphi 0, %s55
      %s57 = sphi 0, %s55
      %s58 = sphi 0, %s57
      %s72 = sphi 0, %s58
      %s76 = sphi 0, %s76
      %s78 = sphi 0, %s76
      %s79 = sphi 0, %s78
      %s93 = sphi 0, %s79
      %s99 = sphi 0, %s101
      %s102 = sphi 0, %s99
      %s103 = sphi 0, %s102
      %s119 = sphi 0, %s103
      %s125 = sphi 0, %s127
      %s128 = sphi 0, %s125
      %s129 = sphi 0, %s128
      %s145 = sphi 0, %s129
    $region4: #{tpu_custom_call.1} parent=1 // loop_header_branch
      %24 = sbr.rel (%p22) target = $region8
    $region5: #{tpu_custom_call.1} parent=1 // loop_body
      %s26 = ssub.s32 %s21, 1
      %s27 = ssub.s32 %s21, 2
      %s28 = sadd.s32 %s21, 1
      %s29 = ssub.s32 %s21, %s28
      %p30 = scmp.eq.s32.totalorder %s29, 0
      %s32 = sadd.s32 %s31, 1
      %s33 = scalar_select %p30, %s31, %s32
      %p36 = pneg %p30
      %p37 = scmp.eq.s32.totalorder %s21, 1
      %p38 = por %p36, %p37
      %p39 = scmp.ne.s32.totalorder %s31, %s34
      %p40 = scmp.eq.s32.totalorder %s21, 0
      %p41 = por %p39, %p40
      %p42 = scmp.ne.s32.totalorder %s31, %s34
      %p43 = scmp.eq.s32.totalorder %s26, 1
      %p44 = por %p42, %p43
      %p45 = scmp.ne.s32.totalorder %s34, %s35
      %p46 = scmp.eq.s32.totalorder %s26, 0
      %p47 = por %p45, %p46
      %p48 = scmp.ne.s32.totalorder %s34, %s35
      %p49 = scmp.eq.s32.totalorder %s27, 1
      %p50 = por %p48, %p49
      %p52 = scmp.ne.s32.totalorder %s35, %s51
      %p53 = scmp.eq.s32.totalorder %s27, 0
      %p54 = por %p52, %p53
      %s56 = sadd.s32 %s55, 1
      %p59 = scmp.eq.s32.totalorder %s21, 1
      %p60 = scmp.ne.s32.totalorder %s55, %s57
      %p61 = scmp.eq.s32.totalorder %s21, 0
      %p62 = por %p60, %p61
      %p63 = scmp.ne.s32.totalorder %s55, %s57
      %p64 = scmp.eq.s32.totalorder %s26, 1
      %p65 = por %p63, %p64
      %p66 = scmp.ne.s32.totalorder %s57, %s58
      %p67 = scmp.eq.s32.totalorder %s26, 0
      %p68 = por %p66, %p67
      %p69 = scmp.ne.s32.totalorder %s57, %s58
      %p70 = scmp.eq.s32.totalorder %s27, 1
      %p71 = por %p69, %p70
      %p73 = scmp.ne.s32.totalorder %s58, %s72
      %p74 = scmp.eq.s32.totalorder %s27, 0
      %p75 = por %p73, %p74
      %s77 = sadd.s32 %s76, 1
      %p80 = scmp.eq.s32.totalorder %s21, 1
      %p81 = scmp.ne.s32.totalorder %s76, %s78
      %p82 = scmp.eq.s32.totalorder %s21, 0
      %p83 = por %p81, %p82
      %p84 = scmp.ne.s32.totalorder %s76, %s78
      %p85 = scmp.eq.s32.totalorder %s26, 1
      %p86 = por %p84, %p85
      %p87 = scmp.ne.s32.totalorder %s78, %s79
      %p88 = scmp.eq.s32.totalorder %s26, 0
      %p89 = por %p87, %p88
      %p90 = scmp.ne.s32.totalorder %s78, %s79
      %p91 = scmp.eq.s32.totalorder %s27, 1
      %p92 = por %p90, %p91
      %p94 = scmp.ne.s32.totalorder %s79, %s93
      %p95 = scmp.eq.s32.totalorder %s27, 0
      %p96 = por %p94, %p95
      %s97 = ssub.s32 %s21, %s28
      %p98 = scmp.eq.s32.totalorder %s97, 0
      %s100 = sadd.s32 %s99, 1
      %s101 = scalar_select %p98, %s99, %s100
      %p104 = pneg %p98
      %p105 = scmp.eq.s32.totalorder %s21, 1
      %p106 = por %p104, %p105
      %p107 = scmp.ne.s32.totalorder %s99, %s102
      %p108 = scmp.eq.s32.totalorder %s21, 0
      %p109 = por %p107, %p108
      %p110 = scmp.ne.s32.totalorder %s99, %s102
      %p111 = scmp.eq.s32.totalorder %s26, 1
      %p112 = por %p110, %p111
      %p113 = scmp.ne.s32.totalorder %s102, %s103
      %p114 = scmp.eq.s32.totalorder %s26, 0
      %p115 = por %p113, %p114
      %p116 = scmp.ne.s32.totalorder %s102, %s103
      %p117 = scmp.eq.s32.totalorder %s27, 1
      %p118 = por %p116, %p117
      %p120 = scmp.ne.s32.totalorder %s103, %s119
      %p121 = scmp.eq.s32.totalorder %s27, 0
      %p122 = por %p120, %p121
      %s123 = ssub.s32 %s21, %s28
      %p124 = scmp.eq.s32.totalorder %s123, 0
      %s126 = sadd.s32 %s125, 1
      %s127 = scalar_select %p124, %s125, %s126
      %p130 = pneg %p124
      %p131 = scmp.eq.s32.totalorder %s21, 1
      %p132 = por %p130, %p131
      %p133 = scmp.ne.s32.totalorder %s125, %s128
      %p134 = scmp.eq.s32.totalorder %s21, 0
      %p135 = por %p133, %p134
      %p136 = scmp.ne.s32.totalorder %s125, %s128
      %p137 = scmp.eq.s32.totalorder %s26, 1
      %p138 = por %p136, %p137
      %p139 = scmp.ne.s32.totalorder %s128, %s129
      %p140 = scmp.eq.s32.totalorder %s26, 0
      %p141 = por %p139, %p140
      %p142 = scmp.ne.s32.totalorder %s128, %s129
      %p143 = scmp.eq.s32.totalorder %s27, 1
      %p144 = por %p142, %p143
      %p146 = scmp.ne.s32.totalorder %s129, %s145
      %p147 = scmp.eq.s32.totalorder %s27, 0
      %p148 = por %p146, %p147
      %p149 = scmp.le.s32.totalorder 1, %s21
      %p150 = scmp.lt.s32.totalorder %s21, 3
      %p151 = pnand %p149, %p150
      %p152 = pneg %p151
      // Predicated region
      $region9: #{tpu_custom_call.1} parent=5 // pred_check
        _
      $region10: #{tpu_custom_call.1} parent=5 // pred_check_branch
        %154 = sbr.rel (%p151) target = $region12
      $region11: #{tpu_custom_call.1} parent=5 // pred_region
        %s155 = ssub.s32 %s21, 1
        // Predicated region
        $region13: #{tpu_custom_call.1} parent=11 // pred_check
          %p156 = pneg %p68
        $region14: #{tpu_custom_call.1} parent=11 // pred_check_branch
          %158 = sbr.rel (%p156) target = $region16
        $region15: #{tpu_custom_call.1} parent=11 // pred_region
          %s160 = ssub.s32 2048, 2048
          %161 = vsyncadd [#allocation6], %s160
          %s162 = sshll.u32 [#allocation5], 4
          %s163 = int_to_ptr.vmem [resolvable:$true] %s162
          %168 = dma.hbm_to_vmem [thread:$0]  %s1, 2048, %s163, [#allocation6], 128, 128, 8
        $region16: #{tpu_custom_call.1} parent=11 // pred_fallthru
          _
        // Predicated region
        $region17: #{tpu_custom_call.1} parent=11 // pred_check
          %p169 = pneg %p89
        $region18: #{tpu_custom_call.1} parent=11 // pred_check_branch
          %171 = sbr.rel (%p169) target = $region20
        $region19: #{tpu_custom_call.1} parent=11 // pred_region
          _
        $region20: #{tpu_custom_call.1} parent=11 // pred_fallthru
          _
      $region12: #{tpu_custom_call.1} parent=5 // pred_fallthru
        _
      %p172 = scmp.lt.s32.totalorder %s21, 2
      // Predicated region
      $region21: #{tpu_custom_call.1} parent=5 // pred_check
        %p173 = pneg %p172
      $region22: #{tpu_custom_call.1} parent=5 // pred_check_branch
        %175 = sbr.rel (%p173) target = $region24
      $region23: #{tpu_custom_call.1} parent=5 // pred_region
        // Predicated region
        $region25: #{tpu_custom_call.1} parent=23 // pred_check
          %p176 = pneg %p41
        $region26: #{tpu_custom_call.1} parent=23 // pred_check_branch
          %178 = sbr.rel (%p176) target = $region28
        $region27: #{tpu_custom_call.1} parent=23 // pred_region
          %s179 = sand.u32 %s31, 1
          %s180 = scalar_lea.sflag [#allocation3], %s179
          %s181 = sand.u32 %s31, 1
          %s182 = smul.addr %s181, 16
          %s183 = scalar_lea.vmem [#allocation2], %s182
          %s184 = smul.u32 2, %s21
          %s186 = ssub.s32 256, 256
          %187 = vsyncadd %s180, %s186
          %s188 = smul.addr %s184, 128
          %s189 = scalar_lea.hbm %s0, %s188
          %s190 = sshll.u32 %s183, 4
          %s191 = int_to_ptr.vmem [resolvable:$true] %s190
          %196 = dma.hbm_to_vmem [thread:$0]  %s189, 256, %s191, %s180, 128, 128, 8
        $region28: #{tpu_custom_call.1} parent=23 // pred_fallthru
          _
      $region24: #{tpu_custom_call.1} parent=5 // pred_fallthru
        _
      %p197 = scmp.le.s32.totalorder 1, %s21
      %p198 = scmp.lt.s32.totalorder %s21, 3
      %p199 = pnand %p197, %p198
      %p200 = pneg %p199
      // Predicated region
      $region29: #{tpu_custom_call.1} parent=5 // pred_check
        _
      $region30: #{tpu_custom_call.1} parent=5 // pred_check_branch
        %202 = sbr.rel (%p199) target = $region32
      $region31: #{tpu_custom_call.1} parent=5 // pred_region
        %s203 = ssub.s32 %s21, 1
        %s204 = sand.u32 %s34, 1
        %s205 = scalar_lea.sflag [#allocation3], %s204
        %s206 = sand.u32 %s34, 1
        %s207 = smul.addr %s206, 16
        %s208 = scalar_lea.vmem [#allocation2], %s207
        // Predicated region
        $region33: #{tpu_custom_call.1} parent=31 // pred_check
          %p209 = pneg %p47
        $region34: #{tpu_custom_call.1} parent=31 // pred_check_branch
          %211 = sbr.rel (%p209) target = $region36
        $region35: #{tpu_custom_call.1} parent=31 // pred_region
          %212 = dma.done %s205, 256
        $region36: #{tpu_custom_call.1} parent=31 // pred_fallthru
          _
        // Predicated region
        $region37: #{tpu_custom_call.1} parent=31 // pred_check
          %p213 = pneg %p68
        $region38: #{tpu_custom_call.1} parent=31 // pred_check_branch
          %215 = sbr.rel (%p213) target = $region40
        $region39: #{tpu_custom_call.1} parent=31 // pred_region
          %216 = dma.done [#allocation6], 2048
        $region40: #{tpu_custom_call.1} parent=31 // pred_fallthru
          _
        %s217 = sand.u32 %s34, 1
        %s218 = scalar_lea.sflag [#allocation3], %s217
        %s219 = sand.u32 %s34, 1
        %s220 = smul.addr %s219, 16
        %s221 = scalar_lea.vmem [#allocation2], %s220
        %p222 = pneg %p47
        %p223 = pneg %p44
        %p224 = pneg %p68
        %p225 = pneg %p65
        %p226 = pneg %p89
        %p227 = pneg %p86
        %p228 = pneg %p115
        %p229 = pneg %p112
        %s230 = sand.u32 %s102, 1
        %s231 = scalar_lea.sflag [#allocation4], %s230
        %s232 = sand.u32 %s102, 1
        %s233 = smul.addr %s232, 16
        %s234 = scalar_lea.vmem [#allocation7], %s233
        %p235 = pneg %p141
        %p236 = pneg %p138
        %s237 = sand.u32 %s128, 1
        %s238 = scalar_lea.sflag [#allocation9], %s237
        %s239 = sand.u32 %s128, 1
        %s240 = smul.addr %s239, 16
        %s241 = scalar_lea.vmem [#allocation8], %s240
        %s242 = smul.u32 2, %s26
        %s243 = smul.u32 2, %s26
        %s244 = smul.u32 2, %s26
        %v245 = vld [vmem:[%s208] sm:$0xff]
        %v246 = vld [vmem:[%s208 + $0x8] sm:$0xff]
        %v247 = vld [vmem:[#allocation5] sm:$0xff]
        %v248 = vld [vmem:[#allocation5 + $0x8] sm:$0xff]
        %v249 = vld [vmem:[#allocation5 + $0x10] sm:$0xff]
        %v250 = vld [vmem:[#allocation5 + $0x18] sm:$0xff]
        %v251 = vld [vmem:[#allocation5 + $0x20] sm:$0xff]
        %v252 = vld [vmem:[#allocation5 + $0x28] sm:$0xff]
        %v253 = vld [vmem:[#allocation5 + $0x30] sm:$0xff]
        %v254 = vld [vmem:[#allocation5 + $0x38] sm:$0xff]
        %v255 = vld [vmem:[#allocation5 + $0x40] sm:$0xff]
        %v256 = vld [vmem:[#allocation5 + $0x48] sm:$0xff]
        %v257 = vld [vmem:[#allocation5 + $0x50] sm:$0xff]
        %v258 = vld [vmem:[#allocation5 + $0x58] sm:$0xff]
        %v259 = vld [vmem:[#allocation5 + $0x60] sm:$0xff]
        %v260 = vld [vmem:[#allocation5 + $0x68] sm:$0xff]
        %v261 = vld [vmem:[#allocation5 + $0x70] sm:$0xff]
        %v262 = vld [vmem:[#allocation5 + $0x78] sm:$0xff]
        %v263 = vld [vmem:[%s2] sm:$0x1]
        %v265 = vlaneseq
        %v266 = vshrl.u32 %v265, 7
        %v267 = vsub.s32 0, %v266
        %v268 = vrot.slane %v263, %v267
        %270 = vmatprep.subr.mxu0 0.0
        %271 = vmatpush1.msra.mxu0 %v247
        %272 = vmatprep.subr.mxu0 0.0
        %273 = vmatpush1.msra.mxu0 %v248
        %274 = vmatprep.subr.mxu0 0.0
        %275 = vmatpush1.msra.mxu0 %v249
        %276 = vmatprep.subr.mxu0 0.0
        %277 = vmatpush1.msra.mxu0 %v250
        %278 = vmatprep.subr.mxu0 0.0
        %279 = vmatpush1.msra.mxu0 %v251
        %280 = vmatprep.subr.mxu0 0.0
        %281 = vmatpush1.msra.mxu0 %v252
        %282 = vmatprep.subr.mxu0 0.0
        %283 = vmatpush1.msra.mxu0 %v253
        %284 = vmatprep.subr.mxu0 0.0
        %285 = vmatpush1.msra.mxu0 %v254
        %286 = vmatprep.subr.mxu0 0.0
        %287 = vmatpush1.msra.mxu0 %v255
        %288 = vmatprep.subr.mxu0 0.0
        %289 = vmatpush1.msra.mxu0 %v256
        %290 = vmatprep.subr.mxu0 0.0
        %291 = vmatpush1.msra.mxu0 %v257
        %292 = vmatprep.subr.mxu0 0.0
        %293 = vmatpush1.msra.mxu0 %v258
        %294 = vmatprep.subr.mxu0 0.0
        %295 = vmatpush1.msra.mxu0 %v259
        %296 = vmatprep.subr.mxu0 0.0
        %297 = vmatpush1.msra.mxu0 %v260
        %298 = vmatprep.subr.mxu0 0.0
        %299 = vmatpush1.msra.mxu0 %v261
        %300 = vmatprep.subr.mxu0 0.0
        %301 = vmatpush1.msra.mxu0 %v262
        %302 = vmatprep.subr.mxu0 0.0
        %303 = vmatpush1.msra.mxu0 0.0
        %304 = vmatprep.subr.mxu0 0.0
        %305 = vmatpush1.msra.mxu0 0.0
        %306 = vmatprep.subr.mxu0 0.0
        %307 = vmatpush1.msra.mxu0 0.0
        %308 = vmatprep.subr.mxu0 0.0
        %309 = vmatpush1.msra.mxu0 0.0
        %310 = vmatprep.subr.mxu0 0.0
        %311 = vmatpush1.msra.mxu0 0.0
        %312 = vmatprep.subr.mxu0 0.0
        %313 = vmatpush1.msra.mxu0 0.0
        %314 = vmatprep.subr.mxu0 0.0
        %315 = vmatpush1.msra.mxu0 0.0
        %316 = vmatprep.subr.mxu0 0.0
        %317 = vmatpush1.msra.mxu0 0.0
        %318 = vmatprep.subr.mxu0 0.0
        %319 = vmatpush1.msra.mxu0 0.0
        %320 = vmatprep.subr.mxu0 0.0
        %321 = vmatpush1.msra.mxu0 0.0
        %322 = vmatprep.subr.mxu0 0.0
        %323 = vmatpush1.msra.mxu0 0.0
        %324 = vmatprep.subr.mxu0 0.0
        %325 = vmatpush1.msra.mxu0 0.0
        %326 = vmatprep.subr.mxu0 0.0
        %327 = vmatpush1.msra.mxu0 0.0
        %328 = vmatprep.subr.mxu0 0.0
        %329 = vmatpush1.msra.mxu0 0.0
        %330 = vmatprep.subr.mxu0 0.0
        %331 = vmatpush1.msra.mxu0 0.0
        %332 = vmatprep.subr.mxu0 0.0
        %333 = vmatpush1.msra.mxu0 0.0
        %334 = vmatprep.mubr.f32.mxu0 0.0
        %335 = vmatmul.mubr.f32.gmra.mrb[0].mxu0 %v245
        %v336 = vpop.f32.mrb[0].mxu0
        %v337 = vadd.f32 %v268, %v336
        %v338 = vpop.f32.mrb[0].mxu0
        %339 = vmatprep.mubr.f32.mxu0 0.0
        %340 = vmatmul.mubr.f32.gmra.mrb[0].mxu0 %v246
        %v341 = vpop.f32.mrb[0].mxu0
        %v342 = vadd.f32 %v268, %v341
        %v343 = vpop.f32.mrb[0].mxu0
        %344 = vdwg.mxu0
        %v345 = vmul.f32 %v337, %v337
        %v346 = vmul.f32 %v342, %v342
        %347 = vadd.xlane.f32.xlu0 %v345
        %v348 = vpop.xlane.xlu0 %347
        %349 = vadd.xlane.f32.xlu0 %v346
        %v350 = vpop.xlane.xlu0 %349
        %v351 = vmax.f32 %v348, 1e-24
        %v352 = vmax.f32 %v350, 1e-24
        %v353 = vrsqrt.pop %v351
        %v354 = vrsqrt.pop %v352
        %v355 = vmul.f32 %v337, %v353
        %v356 = vmul.f32 %v342, %v354
        %357 = vst [vmem:[%s234] sm:$0xff] %v337
        %358 = vst [vmem:[%s234 + $0x8] sm:$0xff] %v342
        %359 = vst [vmem:[%s241] sm:$0xff] %v355
        %360 = vst [vmem:[%s241 + $0x8] sm:$0xff] %v356
        %s361 = sand.u32 %s102, 1
        %s362 = scalar_lea.sflag [#allocation4], %s361
        %s363 = sand.u32 %s102, 1
        %s364 = smul.addr %s363, 16
        %s365 = scalar_lea.vmem [#allocation7], %s364
        %s366 = sand.u32 %s128, 1
        %s367 = scalar_lea.sflag [#allocation9], %s366
        %s368 = sand.u32 %s128, 1
        %s369 = smul.addr %s368, 16
        %s370 = scalar_lea.vmem [#allocation8], %s369
        // Predicated region
        $region41: #{tpu_custom_call.1} parent=31 // pred_check
          %p371 = pneg %p112
        $region42: #{tpu_custom_call.1} parent=31 // pred_check_branch
          %373 = sbr.rel (%p371) target = $region44
        $region43: #{tpu_custom_call.1} parent=31 // pred_region
          %s374 = smul.u32 2, %s26
          %s376 = ssub.s32 256, 256
          %377 = vsyncadd %s362, %s376
          %s378 = smul.addr %s374, 128
          %s379 = scalar_lea.hbm %s3, %s378
          %s380 = sshll.u32 %s365, 4
          %s381 = int_to_ptr.vmem [resolvable:$true] %s380
          %386 = dma.vmem_to_hbm [thread:$0]  %s381, 256, %s379, %s362, 128, 128, 8
        $region44: #{tpu_custom_call.1} parent=31 // pred_fallthru
          _
        // Predicated region
        $region45: #{tpu_custom_call.1} parent=31 // pred_check
          %p387 = pneg %p138
        $region46: #{tpu_custom_call.1} parent=31 // pred_check_branch
          %389 = sbr.rel (%p387) target = $region48
        $region47: #{tpu_custom_call.1} parent=31 // pred_region
          %s390 = smul.u32 2, %s26
          %s392 = ssub.s32 256, 256
          %393 = vsyncadd %s367, %s392
          %s394 = smul.addr %s390, 128
          %s395 = scalar_lea.hbm %s4, %s394
          %s396 = sshll.u32 %s370, 4
          %s397 = int_to_ptr.vmem [resolvable:$true] %s396
          %402 = dma.vmem_to_hbm [thread:$0]  %s397, 256, %s395, %s367, 128, 128, 8
        $region48: #{tpu_custom_call.1} parent=31 // pred_fallthru
          _
      $region32: #{tpu_custom_call.1} parent=5 // pred_fallthru
        _
      %p403 = scmp.le.s32.totalorder 2, %s21
      // Predicated region
      $region49: #{tpu_custom_call.1} parent=5 // pred_check
        %p404 = pneg %p403
      $region50: #{tpu_custom_call.1} parent=5 // pred_check_branch
        %406 = sbr.rel (%p404) target = $region52
      $region51: #{tpu_custom_call.1} parent=5 // pred_region
        %s407 = ssub.s32 %s21, 2
        // Predicated region
        $region53: #{tpu_custom_call.1} parent=51 // pred_check
          %p408 = pneg %p118
        $region54: #{tpu_custom_call.1} parent=51 // pred_check_branch
          %410 = sbr.rel (%p408) target = $region56
        $region55: #{tpu_custom_call.1} parent=51 // pred_region
          %s411 = sand.u32 %s103, 1
          %s412 = scalar_lea.sflag [#allocation4], %s411
          %s413 = sand.u32 %s103, 1
          %s414 = smul.addr %s413, 16
          %s415 = scalar_lea.vmem [#allocation7], %s414
          %416 = dma.done %s412, 256
        $region56: #{tpu_custom_call.1} parent=51 // pred_fallthru
          _
        // Predicated region
        $region57: #{tpu_custom_call.1} parent=51 // pred_check
          %p417 = pneg %p144
        $region58: #{tpu_custom_call.1} parent=51 // pred_check_branch
          %419 = sbr.rel (%p417) target = $region60
        $region59: #{tpu_custom_call.1} parent=51 // pred_region
          %s420 = sand.u32 %s129, 1
          %s421 = scalar_lea.sflag [#allocation9], %s420
          %s422 = sand.u32 %s129, 1
          %s423 = smul.addr %s422, 16
          %s424 = scalar_lea.vmem [#allocation8], %s423
          %425 = dma.done %s421, 256
        $region60: #{tpu_custom_call.1} parent=51 // pred_fallthru
          _
      $region52: #{tpu_custom_call.1} parent=5 // pred_fallthru
        _
    $region6: #{tpu_custom_call.1} parent=1 // loop_footer
      %s25 = sadd.s32 1, %s21
    $region7: #{tpu_custom_call.1} parent=1 // loop_footer_branch
      %20 = sbr.rel target = $region3
    $region8: #{tpu_custom_call.1} parent=1 // loop_exit
      _
    %426 = vsyncpa [#allocation3], 1
    %s427 = scalar_lea.sflag [#allocation3], 1
    %428 = vsyncpa %s427, 1
    %429 = vsyncpa [#allocation6], 1
    %430 = vsyncpa [#allocation4], 1
    %s431 = scalar_lea.sflag [#allocation4], 1
    %432 = vsyncpa %s431, 1
    %433 = vsyncpa [#allocation9], 1
    %s434 = scalar_lea.sflag [#allocation9], 1
    %435 = vsyncpa %s434, 1

</llo_original>
